<compile_context>
chip_gen: v5e
topology: v5e:2x2
jax: 0.10.0
libtpu: 0.0.40
codegen_flags: <defaults>
</compile_context>

<pallas_src>
import jax
import jax.numpy as jnp
from jax.experimental import pallas as pl
from jax.experimental.pallas import tpu as pltpu


def _rnn_kernel(x_ref, h0_ref, wih_ref, whh_ref, who_ref, bi_ref, bo_ref,
                out_ref, hlast_ref):
    B, H = h0_ref.shape            # (batch, hidden)
    SB = x_ref.shape[0]            # S * B (x is pre-flattened in the wrapper)
    S = SB // B

    # ---- Hoisted input projection: one MXU pass, b_i folded in. ----
    pre_x = (jnp.dot(x_ref[...], wih_ref[...],
                     preferred_element_type=jnp.float32)
             + bi_ref[...])                                    # (S*B, H)

    # ---- Sequential recurrence: only h @ W_hh + tanh per step. ----
    w_hh = whh_ref[...]
    h = h0_ref[...]                                            # (B, H)
    hs = []
    for t in range(S):             # S is a compile-time constant; fully unrolled
        h = jnp.tanh(pre_x[t * B:(t + 1) * B, :]
                     + jnp.dot(h, w_hh,
                               preferred_element_type=jnp.float32))
        hs.append(h)
    h_all = jnp.concatenate(hs, axis=0)                        # (S*B, H)

    hlast_ref[...] = h.astype(hlast_ref.dtype)                 # single store

    # ---- Hoisted output projection: one MXU pass + leaky_relu (slope 0.01). ----
    pre_o = (jnp.dot(h_all, who_ref[...],
                     preferred_element_type=jnp.float32)
             + bo_ref[...])                                    # (S*B, O)
    o = jnp.where(pre_o >= 0, pre_o, jnp.float32(0.01) * pre_o)
    out_ref[...] = o.astype(out_ref.dtype)                     # single block store


def my_rnn_forward(x, h0, w_ih, w_hh, w_ho, b_i, b_o):
    """x: [S, B, I]; returns (outputs [S, B, O], h_last [B, H])."""
    S, B, I = x.shape
    H = w_ih.shape[1]
    O = w_ho.shape[1]

    x_flat = x.reshape(S * B, I)        # free layout change outside the kernel
    b_i2 = b_i.reshape(1, H)            # keep biases 2D for clean VMEM tiles
    b_o2 = b_o.reshape(1, O)

    out_shapes = (
        jax.ShapeDtypeStruct((S * B, O), jnp.float32),   # per-step outputs (flat)
        jax.ShapeDtypeStruct((B, H), jnp.float32),       # final hidden state
    )

    grid_spec = pltpu.PrefetchScalarGridSpec(
        num_scalar_prefetch=0,
        grid=(1,),                       # single invocation: time loop lives in-kernel
        in_specs=[
            pl.BlockSpec((S * B, I), lambda i: (0, 0)),   # whole x (flattened)
            pl.BlockSpec((B, H), lambda i: (0, 0)),       # h0
            pl.BlockSpec((I, H), lambda i: (0, 0)),       # W_ih
            pl.BlockSpec((H, H), lambda i: (0, 0)),       # W_hh
            pl.BlockSpec((H, O), lambda i: (0, 0)),       # W_ho
            pl.BlockSpec((1, H), lambda i: (0, 0)),       # b_i
            pl.BlockSpec((1, O), lambda i: (0, 0)),       # b_o
        ],
        out_specs=[
            pl.BlockSpec((S * B, O), lambda i: (0, 0)),
            pl.BlockSpec((B, H), lambda i: (0, 0)),
        ],
    )

    out_flat, h_last = pl.pallas_call(
        _rnn_kernel,
        out_shape=out_shapes,
        grid_spec=grid_spec,
        compiler_params=pltpu.CompilerParams(
            dimension_semantics=("arbitrary",)),
    )(x_flat, h0, w_ih, w_hh, w_ho, b_i2, b_o2)

    return out_flat.reshape(S, B, O), h_last


if __name__ == "__main__":
    # Small shapes consistent with the module: x is [seq_len, batch, input_size]
    seq_len, batch, input_size = 8, 8, 16
    hidden_size, output_size = 32, 16

    key = jax.random.PRNGKey(0)
    kx, kih, khh, kho, kh0 = jax.random.split(key, 5)

    # Deterministic parameter init mirroring torch.normal(0, 0.01, shape)
    w_ih = 0.01 * jax.random.normal(kih, (input_size, hidden_size), jnp.float32)
    w_hh = 0.01 * jax.random.normal(khh, (hidden_size, hidden_size), jnp.float32)
    w_ho = 0.01 * jax.random.normal(kho, (hidden_size, output_size), jnp.float32)
    b_i = jnp.zeros((hidden_size,), jnp.float32)
    b_o = jnp.zeros((output_size,), jnp.float32)

    x = jax.random.normal(kx, (seq_len, batch, input_size), jnp.float32)
    # The PyTorch forward samples h ~ N(0, 0.01) each call; we sample it
    # deterministically here and feed it into the kernel.
    h0 = 0.01 * jax.random.normal(kh0, (batch, hidden_size), jnp.float32)

    outputs, h_last = my_rnn_forward(x, h0, w_ih, w_hh, w_ho, b_i, b_o)
    jax.block_until_ready((outputs, h_last))

    # Pure-JAX reference for a sanity check.
    def ref_forward(x, h0):
        h = h0
        outs = []
        for i in range(x.shape[0]):
            h = jnp.tanh(x[i] @ w_ih + h @ w_hh + b_i)
            o = h @ w_ho + b_o
            o = jnp.where(o >= 0, o, 0.01 * o)
            outs.append(o)
        return jnp.stack(outs, 0), h

    ref_out, ref_h = ref_forward(x, h0)
    assert outputs.shape == (seq_len, batch, output_size)
    assert h_last.shape == (batch, hidden_size)
    assert jnp.allclose(outputs, ref_out, atol=1e-5, rtol=1e-5)
    assert jnp.allclose(h_last, ref_h, atol=1e-5, rtol=1e-5)

    print("KERNEL_OK")
</pallas_src>

<mosaic_0001>
module attributes {stable_mosaic.version = 11 : i64} {
  func.func @_rnn_kernel(%arg0: i32, %arg1: memref<64x16xf32, #tpu.memory_space<vmem>>, %arg2: memref<8x32xf32, #tpu.memory_space<vmem>>, %arg3: memref<16x32xf32, #tpu.memory_space<vmem>>, %arg4: memref<32x32xf32, #tpu.memory_space<vmem>>, %arg5: memref<32x16xf32, #tpu.memory_space<vmem>>, %arg6: memref<1x32xf32, #tpu.memory_space<vmem>>, %arg7: memref<1x16xf32, #tpu.memory_space<vmem>>, %arg8: memref<64x16xf32, #tpu.memory_space<vmem>>, %arg9: memref<8x32xf32, #tpu.memory_space<vmem>>) attributes {dimension_semantics = [#tpu.dimension_semantics<arbitrary>], iteration_bounds = array<i64: 1>, scalar_prefetch = 0 : i64, scratch_operands = 0 : i64, tpu.core_type = #tpu.core_type<tc>, window_params = [{pipeline_mode = #tpu.pipeline_mode<synchronous>, transform_indices = @transform_0, window_bounds = array<i64: 64, 16>}, {pipeline_mode = #tpu.pipeline_mode<synchronous>, transform_indices = @transform_1, window_bounds = array<i64: 8, 32>}, {pipeline_mode = #tpu.pipeline_mode<synchronous>, transform_indices = @transform_2, window_bounds = array<i64: 16, 32>}, {pipeline_mode = #tpu.pipeline_mode<synchronous>, transform_indices = @transform_3, window_bounds = array<i64: 32, 32>}, {pipeline_mode = #tpu.pipeline_mode<synchronous>, transform_indices = @transform_4, window_bounds = array<i64: 32, 16>}, {pipeline_mode = #tpu.pipeline_mode<synchronous>, transform_indices = @transform_5, window_bounds = array<i64: 1, 32>}, {pipeline_mode = #tpu.pipeline_mode<synchronous>, transform_indices = @transform_6, window_bounds = array<i64: 1, 16>}, {pipeline_mode = #tpu.pipeline_mode<synchronous>, transform_indices = @transform_7, window_bounds = array<i64: 64, 16>}, {pipeline_mode = #tpu.pipeline_mode<synchronous>, transform_indices = @transform_8, window_bounds = array<i64: 8, 32>}]} {
    %c0 = arith.constant 0 : index
    %c0_0 = arith.constant 0 : index
    %0 = vector.load %arg1[%c0, %c0_0] : memref<64x16xf32, #tpu.memory_space<vmem>>, vector<64x16xf32>
    %c0_1 = arith.constant 0 : index
    %c0_2 = arith.constant 0 : index
    %1 = vector.load %arg3[%c0_1, %c0_2] : memref<16x32xf32, #tpu.memory_space<vmem>>, vector<16x32xf32>
    %cst = arith.constant dense<0.000000e+00> : vector<64x32xf32>
    %2 = tpu.matmul %0, %1, %cst {dimension_numbers = #tpu.dot_dimension_numbers<[1], [0], [0], [1], [0, 0, 1, 1], [], []>} : vector<64x16xf32>, vector<16x32xf32>, vector<64x32xf32> -> vector<64x32xf32>
    %c0_3 = arith.constant 0 : index
    %c0_4 = arith.constant 0 : index
    %3 = vector.load %arg6[%c0_3, %c0_4] : memref<1x32xf32, #tpu.memory_space<vmem>>, vector<1x32xf32>
    %4 = vector.broadcast %3 : vector<1x32xf32> to vector<64x32xf32>
    %5 = arith.addf %2, %4 : vector<64x32xf32>
    %c0_5 = arith.constant 0 : index
    %c0_6 = arith.constant 0 : index
    %6 = vector.load %arg4[%c0_5, %c0_6] : memref<32x32xf32, #tpu.memory_space<vmem>>, vector<32x32xf32>
    %c0_7 = arith.constant 0 : index
    %c0_8 = arith.constant 0 : index
    %7 = vector.load %arg2[%c0_7, %c0_8] : memref<8x32xf32, #tpu.memory_space<vmem>>, vector<8x32xf32>
    %8 = vector.extract_strided_slice %5 {offsets = [0, 0], sizes = [8, 32], strides = [1, 1]} : vector<64x32xf32> to vector<8x32xf32>
    %cst_9 = arith.constant dense<0.000000e+00> : vector<8x32xf32>
    %9 = tpu.matmul %7, %6, %cst_9 {dimension_numbers = #tpu.dot_dimension_numbers<[1], [0], [0], [1], [0, 0, 1, 1], [], []>} : vector<8x32xf32>, vector<32x32xf32>, vector<8x32xf32> -> vector<8x32xf32>
    %10 = arith.addf %8, %9 : vector<8x32xf32>
    %11 = math.tanh %10 : vector<8x32xf32>
    %12 = vector.extract_strided_slice %5 {offsets = [8, 0], sizes = [8, 32], strides = [1, 1]} : vector<64x32xf32> to vector<8x32xf32>
    %cst_10 = arith.constant dense<0.000000e+00> : vector<8x32xf32>
    %13 = tpu.matmul %11, %6, %cst_10 {dimension_numbers = #tpu.dot_dimension_numbers<[1], [0], [0], [1], [0, 0, 1, 1], [], []>} : vector<8x32xf32>, vector<32x32xf32>, vector<8x32xf32> -> vector<8x32xf32>
    %14 = arith.addf %12, %13 : vector<8x32xf32>
    %15 = math.tanh %14 : vector<8x32xf32>
    %16 = vector.extract_strided_slice %5 {offsets = [16, 0], sizes = [8, 32], strides = [1, 1]} : vector<64x32xf32> to vector<8x32xf32>
    %cst_11 = arith.constant dense<0.000000e+00> : vector<8x32xf32>
    %17 = tpu.matmul %15, %6, %cst_11 {dimension_numbers = #tpu.dot_dimension_numbers<[1], [0], [0], [1], [0, 0, 1, 1], [], []>} : vector<8x32xf32>, vector<32x32xf32>, vector<8x32xf32> -> vector<8x32xf32>
    %18 = arith.addf %16, %17 : vector<8x32xf32>
    %19 = math.tanh %18 : vector<8x32xf32>
    %20 = vector.extract_strided_slice %5 {offsets = [24, 0], sizes = [8, 32], strides = [1, 1]} : vector<64x32xf32> to vector<8x32xf32>
    %cst_12 = arith.constant dense<0.000000e+00> : vector<8x32xf32>
    %21 = tpu.matmul %19, %6, %cst_12 {dimension_numbers = #tpu.dot_dimension_numbers<[1], [0], [0], [1], [0, 0, 1, 1], [], []>} : vector<8x32xf32>, vector<32x32xf32>, vector<8x32xf32> -> vector<8x32xf32>
    %22 = arith.addf %20, %21 : vector<8x32xf32>
    %23 = math.tanh %22 : vector<8x32xf32>
    %24 = vector.extract_strided_slice %5 {offsets = [32, 0], sizes = [8, 32], strides = [1, 1]} : vector<64x32xf32> to vector<8x32xf32>
    %cst_13 = arith.constant dense<0.000000e+00> : vector<8x32xf32>
    %25 = tpu.matmul %23, %6, %cst_13 {dimension_numbers = #tpu.dot_dimension_numbers<[1], [0], [0], [1], [0, 0, 1, 1], [], []>} : vector<8x32xf32>, vector<32x32xf32>, vector<8x32xf32> -> vector<8x32xf32>
    %26 = arith.addf %24, %25 : vector<8x32xf32>
    %27 = math.tanh %26 : vector<8x32xf32>
    %28 = vector.extract_strided_slice %5 {offsets = [40, 0], sizes = [8, 32], strides = [1, 1]} : vector<64x32xf32> to vector<8x32xf32>
    %cst_14 = arith.constant dense<0.000000e+00> : vector<8x32xf32>
    %29 = tpu.matmul %27, %6, %cst_14 {dimension_numbers = #tpu.dot_dimension_numbers<[1], [0], [0], [1], [0, 0, 1, 1], [], []>} : vector<8x32xf32>, vector<32x32xf32>, vector<8x32xf32> -> vector<8x32xf32>
    %30 = arith.addf %28, %29 : vector<8x32xf32>
    %31 = math.tanh %30 : vector<8x32xf32>
    %32 = vector.extract_strided_slice %5 {offsets = [48, 0], sizes = [8, 32], strides = [1, 1]} : vector<64x32xf32> to vector<8x32xf32>
    %cst_15 = arith.constant dense<0.000000e+00> : vector<8x32xf32>
    %33 = tpu.matmul %31, %6, %cst_15 {dimension_numbers = #tpu.dot_dimension_numbers<[1], [0], [0], [1], [0, 0, 1, 1], [], []>} : vector<8x32xf32>, vector<32x32xf32>, vector<8x32xf32> -> vector<8x32xf32>
    %34 = arith.addf %32, %33 : vector<8x32xf32>
    %35 = math.tanh %34 : vector<8x32xf32>
    %36 = vector.extract_strided_slice %5 {offsets = [56, 0], sizes = [8, 32], strides = [1, 1]} : vector<64x32xf32> to vector<8x32xf32>
    %cst_16 = arith.constant dense<0.000000e+00> : vector<8x32xf32>
    %37 = tpu.matmul %35, %6, %cst_16 {dimension_numbers = #tpu.dot_dimension_numbers<[1], [0], [0], [1], [0, 0, 1, 1], [], []>} : vector<8x32xf32>, vector<32x32xf32>, vector<8x32xf32> -> vector<8x32xf32>
    %38 = arith.addf %36, %37 : vector<8x32xf32>
    %39 = math.tanh %38 : vector<8x32xf32>
    %40 = tpu.concatenate %11, %15, %19, %23, %27, %31, %35, %39 in 0 : vector<8x32xf32>, vector<8x32xf32>, vector<8x32xf32>, vector<8x32xf32>, vector<8x32xf32>, vector<8x32xf32>, vector<8x32xf32>, vector<8x32xf32> -> vector<64x32xf32>
    %c0_17 = arith.constant 0 : index
    %c0_18 = arith.constant 0 : index
    %41 = vector.load %arg9[%c0_17, %c0_18] : memref<8x32xf32, #tpu.memory_space<vmem>>, vector<8x32xf32>
    tpu.vector_store %arg9[%c0_17, %c0_18], %39 {strides = array<i32>} : memref<8x32xf32, #tpu.memory_space<vmem>>, vector<8x32xf32>,
    %c0_19 = arith.constant 0 : index
    %c0_20 = arith.constant 0 : index
    %42 = vector.load %arg5[%c0_19, %c0_20] : memref<32x16xf32, #tpu.memory_space<vmem>>, vector<32x16xf32>
    %cst_21 = arith.constant dense<0.000000e+00> : vector<64x16xf32>
    %43 = tpu.matmul %40, %42, %cst_21 {dimension_numbers = #tpu.dot_dimension_numbers<[1], [0], [0], [1], [0, 0, 1, 1], [], []>} : vector<64x32xf32>, vector<32x16xf32>, vector<64x16xf32> -> vector<64x16xf32>
    %c0_22 = arith.constant 0 : index
    %c0_23 = arith.constant 0 : index
    %44 = vector.load %arg7[%c0_22, %c0_23] : memref<1x16xf32, #tpu.memory_space<vmem>>, vector<1x16xf32>
    %45 = vector.broadcast %44 : vector<1x16xf32> to vector<64x16xf32>
    %46 = arith.addf %43, %45 : vector<64x16xf32>
    %cst_24 = arith.constant 0.000000e+00 : f32
    %47 = vector.broadcast %cst_24 : f32 to vector<64x16xf32>
    %48 = arith.cmpf oge, %46, %47 : vector<64x16xf32>
    %cst_25 = arith.constant 0.00999999977 : f32
    %49 = vector.broadcast %cst_25 : f32 to vector<64x16xf32>
    %50 = arith.mulf %49, %46 : vector<64x16xf32>
    %51 = arith.select %48, %46, %50 : vector<64x16xi1>, vector<64x16xf32>
    %c0_26 = arith.constant 0 : index
    %c0_27 = arith.constant 0 : index
    %52 = vector.load %arg8[%c0_26, %c0_27] : memref<64x16xf32, #tpu.memory_space<vmem>>, vector<64x16xf32>
    tpu.vector_store %arg8[%c0_26, %c0_27], %51 {strides = array<i32>} : memref<64x16xf32, #tpu.memory_space<vmem>>, vector<64x16xf32>,
    return
  }
  func.func @transform_0(%arg0: i32) -> (i32, i32) {
    %c0_i32 = arith.constant 0 : i32
    %c0_i32_0 = arith.constant 0 : i32
    %c0_i32_1 = arith.constant 0 : i32
    return %c0_i32, %c0_i32_0 : i32, i32
  }
  func.func @transform_1(%arg0: i32) -> (i32, i32) {
    %c0_i32 = arith.constant 0 : i32
    %c0_i32_0 = arith.constant 0 : i32
    %c0_i32_1 = arith.constant 0 : i32
    return %c0_i32, %c0_i32_0 : i32, i32
  }
  func.func @transform_2(%arg0: i32) -> (i32, i32) {
    %c0_i32 = arith.constant 0 : i32
    %c0_i32_0 = arith.constant 0 : i32
    %c0_i32_1 = arith.constant 0 : i32
    return %c0_i32, %c0_i32_0 : i32, i32
  }
  func.func @transform_3(%arg0: i32) -> (i32, i32) {
    %c0_i32 = arith.constant 0 : i32
    %c0_i32_0 = arith.constant 0 : i32
    %c0_i32_1 = arith.constant 0 : i32
    return %c0_i32, %c0_i32_0 : i32, i32
  }
  func.func @transform_4(%arg0: i32) -> (i32, i32) {
    %c0_i32 = arith.constant 0 : i32
    %c0_i32_0 = arith.constant 0 : i32
    %c0_i32_1 = arith.constant 0 : i32
    return %c0_i32, %c0_i32_0 : i32, i32
  }
  func.func @transform_5(%arg0: i32) -> (i32, i32) {
    %c0_i32 = arith.constant 0 : i32
    %c0_i32_0 = arith.constant 0 : i32
    %c0_i32_1 = arith.constant 0 : i32
    return %c0_i32, %c0_i32_0 : i32, i32
  }
  func.func @transform_6(%arg0: i32) -> (i32, i32) {
    %c0_i32 = arith.constant 0 : i32
    %c0_i32_0 = arith.constant 0 : i32
    %c0_i32_1 = arith.constant 0 : i32
    return %c0_i32, %c0_i32_0 : i32, i32
  }
  func.func @transform_7(%arg0: i32) -> (i32, i32) {
    %c0_i32 = arith.constant 0 : i32
    %c0_i32_0 = arith.constant 0 : i32
    %c0_i32_1 = arith.constant 0 : i32
    return %c0_i32, %c0_i32_0 : i32, i32
  }
  func.func @transform_8(%arg0: i32) -> (i32, i32) {
    %c0_i32 = arith.constant 0 : i32
    %c0_i32_0 = arith.constant 0 : i32
    %c0_i32_1 = arith.constant 0 : i32
    return %c0_i32, %c0_i32_0 : i32, i32
  }
}

</mosaic_0001>

<llo_original>
// kernel: tpu_custom_call.1
$region0: #{tpu_custom_call.1}
  #allocation0 [shape = 'u32[]', space=smem, size = 0x4, offset = 0x4, fixed_abs, tag = 'smem constant byte address 0x4 - core index']
  #allocation1 [shape = 'u32[72,128]{1,0:T(1,128)}', space=vmem, size = 0x9000, scoped, tag = 'internal scratch']
  %s0 = inlined_call_operand.vmem [shape: f32[64,16], index: 0, kind: input, shape index: {}]
  %s1 = inlined_call_operand.vmem [shape: f32[8,32], index: 1, kind: input, shape index: {}]
  %s2 = inlined_call_operand.vmem [shape: f32[16,32], index: 2, kind: input, shape index: {}]
  %s3 = inlined_call_operand.vmem [shape: f32[32,32], index: 3, kind: input, shape index: {}]
  %s4 = inlined_call_operand.vmem [shape: f32[32,16], index: 4, kind: input, shape index: {}]
  %s5 = inlined_call_operand.vmem [shape: f32[1,32], index: 5, kind: input, shape index: {}]
  %s6 = inlined_call_operand.vmem [shape: f32[1,16], index: 6, kind: input, shape index: {}]
  %s7 = inlined_call_operand.vmem [shape: f32[64,16], index: 7, kind: output, shape index: {0}]
  %s8 = inlined_call_operand.hbm [shape: f32[8,32], index: 8, kind: output, shape index: {1}]
  %9 = xla_tuple %s7, %s8
  %s10 = sld [smem:[#allocation0]]
  $region46: #{tpu_custom_call.1} parent=0
    _
  %s12 = ssub.s32 1, %s10
  %s13 = scalar_select 0, %s12, %s10
  $region1: #{tpu_custom_call.1} parent=0
    #allocation2 [shape = 'u8[4096]{0}', space=vmem, size = 0x1000, scoped, tag = 'output window, operand 1, single buffered']
    #allocation3 [shape = 's32[1]{0}', space=sflag, size = 0x4, scoped, tag = 'scoped memory for tpu_custom_call.1']
    %14 = vsyncpa [#allocation3], 0
    // Predicated region
    $region2: #{tpu_custom_call.1} parent=1 // pred_check
      _
    $region3: #{tpu_custom_call.1} parent=1 // pred_check_branch
      %16 = sbr.rel (0) target = $region5
    $region4: #{tpu_custom_call.1} parent=1 // pred_region
      _
    $region5: #{tpu_custom_call.1} parent=1 // pred_fallthru
      _
    // Predicated region
    $region6: #{tpu_custom_call.1} parent=1 // pred_check
      _
    $region7: #{tpu_custom_call.1} parent=1 // pred_check_branch
      %18 = sbr.rel (0) target = $region9
    $region8: #{tpu_custom_call.1} parent=1 // pred_region
      _
    $region9: #{tpu_custom_call.1} parent=1 // pred_fallthru
      _
    // Predicated region
    $region10: #{tpu_custom_call.1} parent=1 // pred_check
      _
    $region11: #{tpu_custom_call.1} parent=1 // pred_check_branch
      %20 = sbr.rel (0) target = $region13
    $region12: #{tpu_custom_call.1} parent=1 // pred_region
      _
    $region13: #{tpu_custom_call.1} parent=1 // pred_fallthru
      _
    // Predicated region
    $region14: #{tpu_custom_call.1} parent=1 // pred_check
      _
    $region15: #{tpu_custom_call.1} parent=1 // pred_check_branch
      %22 = sbr.rel (0) target = $region17
    $region16: #{tpu_custom_call.1} parent=1 // pred_region
      _
    $region17: #{tpu_custom_call.1} parent=1 // pred_fallthru
      _
    // Predicated region
    $region18: #{tpu_custom_call.1} parent=1 // pred_check
      _
    $region19: #{tpu_custom_call.1} parent=1 // pred_check_branch
      %24 = sbr.rel (0) target = $region21
    $region20: #{tpu_custom_call.1} parent=1 // pred_region
      _
    $region21: #{tpu_custom_call.1} parent=1 // pred_fallthru
      _
    // Predicated region
    $region22: #{tpu_custom_call.1} parent=1 // pred_check
      _
    $region23: #{tpu_custom_call.1} parent=1 // pred_check_branch
      %26 = sbr.rel (0) target = $region25
    $region24: #{tpu_custom_call.1} parent=1 // pred_region
      _
    $region25: #{tpu_custom_call.1} parent=1 // pred_fallthru
      _
    // Predicated region
    $region26: #{tpu_custom_call.1} parent=1 // pred_check
      _
    $region27: #{tpu_custom_call.1} parent=1 // pred_check_branch
      %28 = sbr.rel (0) target = $region29
    $region28: #{tpu_custom_call.1} parent=1 // pred_region
      _
    $region29: #{tpu_custom_call.1} parent=1 // pred_fallthru
      _
    %v29 = vld [vmem:[%s0] sm:$0xff]
    %v30 = vld [vmem:[%s0 + $0x8] sm:$0xff]
    %v31 = vld [vmem:[%s0 + $0x10] sm:$0xff]
    %v32 = vld [vmem:[%s0 + $0x18] sm:$0xff]
    %v33 = vld [vmem:[%s0 + $0x20] sm:$0xff]
    %v34 = vld [vmem:[%s0 + $0x28] sm:$0xff]
    %v35 = vld [vmem:[%s0 + $0x30] sm:$0xff]
    %v36 = vld [vmem:[%s0 + $0x38] sm:$0xff]
    %v37 = vld [vmem:[%s2] sm:$0xff]
    %v38 = vld [vmem:[%s2 + $0x8] sm:$0xff]
    %v39 = vld [vmem:[%s5] sm:$0x1]
    %v41 = vperm.slane %v39, 0
    %vm43 = vcmask 130048
    %v45 = vsel %vm43, %v29, 0
    %v48 = vsel %vm43, %v30, 0
    %v51 = vsel %vm43, %v31, 0
    %v54 = vsel %vm43, %v32, 0
    %v57 = vsel %vm43, %v33, 0
    %v60 = vsel %vm43, %v34, 0
    %v63 = vsel %vm43, %v35, 0
    %v66 = vsel %vm43, %v36, 0
    %68 = vmatpush.msra.mxu0 0.0
    %69 = vmatpush.msra.mxu0 0.0
    %70 = vmatpush.msra.mxu0 0.0
    %71 = vmatpush.msra.mxu0 0.0
    %72 = vmatpush.msra.mxu0 0.0
    %73 = vmatpush.msra.mxu0 0.0
    %74 = vmatpush.msra.mxu0 0.0
    %75 = vmatpush.msra.mxu0 0.0
    %76 = vmatpush.msra.mxu0 0.0
    %77 = vmatpush.msra.mxu0 0.0
    %78 = vmatpush.msra.mxu0 0.0
    %79 = vmatpush.msra.mxu0 0.0
    %80 = vmatpush.msra.mxu0 0.0
    %81 = vmatpush.msra.mxu0 0.0
    %82 = vmatpush.msra.mxu0 %v38
    %83 = vmatpush.msra.mxu0 %v37
    %84 = vmatmul.f32.gmra.mxu0 %v45
    %v85 = vpop.f32.mrf.mxu0
    %v86 = vadd.f32 %v41, %v85
    %87 = vmatmul.f32.gmra.mxu0 %v48
    %v88 = vpop.f32.mrf.mxu0
    %v89 = vadd.f32 %v41, %v88
    %90 = vmatmul.f32.gmra.mxu0 %v51
    %v91 = vpop.f32.mrf.mxu0
    %v92 = vadd.f32 %v41, %v91
    %93 = vmatmul.f32.gmra.mxu0 %v54
    %v94 = vpop.f32.mrf.mxu0
    %v95 = vadd.f32 %v41, %v94
    %96 = vmatmul.f32.gmra.mxu0 %v57
    %v97 = vpop.f32.mrf.mxu0
    %v98 = vadd.f32 %v41, %v97
    %99 = vmatmul.f32.gmra.mxu0 %v60
    %v100 = vpop.f32.mrf.mxu0
    %v101 = vadd.f32 %v41, %v100
    %102 = vmatmul.f32.gmra.mxu0 %v63
    %v103 = vpop.f32.mrf.mxu0
    %v104 = vadd.f32 %v41, %v103
    %105 = vmatmul.f32.gmra.mxu0 %v66
    %v106 = vpop.f32.mrf.mxu0
    %v107 = vadd.f32 %v41, %v106
    %108 = vdwg.mxu0
    %v109 = vld [vmem:[%s3] sm:$0xff]
    %v110 = vld [vmem:[%s3 + $0x8] sm:$0xff]
    %v111 = vld [vmem:[%s3 + $0x10] sm:$0xff]
    %v112 = vld [vmem:[%s3 + $0x18] sm:$0xff]
    %v113 = vld [vmem:[%s1] sm:$0xff]
    %vm114 = vcmask 261120
    %v116 = vsel %vm114, %v113, 0
    %118 = vmatpush.msra.mxu0 0.0
    %119 = vmatpush.msra.mxu0 0.0
    %120 = vmatpush.msra.mxu0 0.0
    %121 = vmatpush.msra.mxu0 0.0
    %122 = vmatpush.msra.mxu0 0.0
    %123 = vmatpush.msra.mxu0 0.0
    %124 = vmatpush.msra.mxu0 0.0
    %125 = vmatpush.msra.mxu0 0.0
    %126 = vmatpush.msra.mxu0 0.0
    %127 = vmatpush.msra.mxu0 0.0
    %128 = vmatpush.msra.mxu0 0.0
    %129 = vmatpush.msra.mxu0 0.0
    %130 = vmatpush.msra.mxu0 %v112
    %131 = vmatpush.msra.mxu0 %v111
    %132 = vmatpush.msra.mxu0 %v110
    %133 = vmatpush.msra.mxu0 %v109
    %134 = vmatmul.f32.gmra.mxu0 %v116
    %v135 = vpop.f32.mrf.mxu0
    %v136 = vadd.f32 0.0, %v135
    %137 = vdwg.mxu0
    %v138 = vadd.f32 %v86, %v136
    %v139 = vtanh.pop %v138
    %v141 = vsel %vm114, %v139, 0
    %143 = vmatpush.msra.mxu0 0.0
    %144 = vmatpush.msra.mxu0 0.0
    %145 = vmatpush.msra.mxu0 0.0
    %146 = vmatpush.msra.mxu0 0.0
    %147 = vmatpush.msra.mxu0 0.0
    %148 = vmatpush.msra.mxu0 0.0
    %149 = vmatpush.msra.mxu0 0.0
    %150 = vmatpush.msra.mxu0 0.0
    %151 = vmatpush.msra.mxu0 0.0
    %152 = vmatpush.msra.mxu0 0.0
    %153 = vmatpush.msra.mxu0 0.0
    %154 = vmatpush.msra.mxu0 0.0
    %155 = vmatpush.msra.mxu0 %v112
    %156 = vmatpush.msra.mxu0 %v111
    %157 = vmatpush.msra.mxu0 %v110
    %158 = vmatpush.msra.mxu0 %v109
    %159 = vmatmul.f32.gmra.mxu0 %v141
    %v160 = vpop.f32.mrf.mxu0
    %v161 = vadd.f32 0.0, %v160
    %162 = vdwg.mxu0
    %v163 = vadd.f32 %v89, %v161
    %v164 = vtanh.pop %v163
    %v166 = vsel %vm114, %v164, 0
    %168 = vmatpush.msra.mxu0 0.0
    %169 = vmatpush.msra.mxu0 0.0
    %170 = vmatpush.msra.mxu0 0.0
    %171 = vmatpush.msra.mxu0 0.0
    %172 = vmatpush.msra.mxu0 0.0
    %173 = vmatpush.msra.mxu0 0.0
    %174 = vmatpush.msra.mxu0 0.0
    %175 = vmatpush.msra.mxu0 0.0
    %176 = vmatpush.msra.mxu0 0.0
    %177 = vmatpush.msra.mxu0 0.0
    %178 = vmatpush.msra.mxu0 0.0
    %179 = vmatpush.msra.mxu0 0.0
    %180 = vmatpush.msra.mxu0 %v112
    %181 = vmatpush.msra.mxu0 %v111
    %182 = vmatpush.msra.mxu0 %v110
    %183 = vmatpush.msra.mxu0 %v109
    %184 = vmatmul.f32.gmra.mxu0 %v166
    %v185 = vpop.f32.mrf.mxu0
    %v186 = vadd.f32 0.0, %v185
    %187 = vdwg.mxu0
    %v188 = vadd.f32 %v92, %v186
    %v189 = vtanh.pop %v188
    %v191 = vsel %vm114, %v189, 0
    %193 = vmatpush.msra.mxu0 0.0
    %194 = vmatpush.msra.mxu0 0.0
    %195 = vmatpush.msra.mxu0 0.0
    %196 = vmatpush.msra.mxu0 0.0
    %197 = vmatpush.msra.mxu0 0.0
    %198 = vmatpush.msra.mxu0 0.0
    %199 = vmatpush.msra.mxu0 0.0
    %200 = vmatpush.msra.mxu0 0.0
    %201 = vmatpush.msra.mxu0 0.0
    %202 = vmatpush.msra.mxu0 0.0
    %203 = vmatpush.msra.mxu0 0.0
    %204 = vmatpush.msra.mxu0 0.0
    %205 = vmatpush.msra.mxu0 %v112
    %206 = vmatpush.msra.mxu0 %v111
    %207 = vmatpush.msra.mxu0 %v110
    %208 = vmatpush.msra.mxu0 %v109
    %209 = vmatmul.f32.gmra.mxu0 %v191
    %v210 = vpop.f32.mrf.mxu0
    %v211 = vadd.f32 0.0, %v210
    %212 = vdwg.mxu0
    %v213 = vadd.f32 %v95, %v211
    %v214 = vtanh.pop %v213
    %v216 = vsel %vm114, %v214, 0
    %218 = vmatpush.msra.mxu0 0.0
    %219 = vmatpush.msra.mxu0 0.0
    %220 = vmatpush.msra.mxu0 0.0
    %221 = vmatpush.msra.mxu0 0.0
    %222 = vmatpush.msra.mxu0 0.0
    %223 = vmatpush.msra.mxu0 0.0
    %224 = vmatpush.msra.mxu0 0.0
    %225 = vmatpush.msra.mxu0 0.0
    %226 = vmatpush.msra.mxu0 0.0
    %227 = vmatpush.msra.mxu0 0.0
    %228 = vmatpush.msra.mxu0 0.0
    %229 = vmatpush.msra.mxu0 0.0
    %230 = vmatpush.msra.mxu0 %v112
    %231 = vmatpush.msra.mxu0 %v111
    %232 = vmatpush.msra.mxu0 %v110
    %233 = vmatpush.msra.mxu0 %v109
    %234 = vmatmul.f32.gmra.mxu0 %v216
    %v235 = vpop.f32.mrf.mxu0
    %v236 = vadd.f32 0.0, %v235
    %237 = vdwg.mxu0
    %v238 = vadd.f32 %v98, %v236
    %v239 = vtanh.pop %v238
    %v241 = vsel %vm114, %v239, 0
    %243 = vmatpush.msra.mxu0 0.0
    %244 = vmatpush.msra.mxu0 0.0
    %245 = vmatpush.msra.mxu0 0.0
    %246 = vmatpush.msra.mxu0 0.0
    %247 = vmatpush.msra.mxu0 0.0
    %248 = vmatpush.msra.mxu0 0.0
    %249 = vmatpush.msra.mxu0 0.0
    %250 = vmatpush.msra.mxu0 0.0
    %251 = vmatpush.msra.mxu0 0.0
    %252 = vmatpush.msra.mxu0 0.0
    %253 = vmatpush.msra.mxu0 0.0
    %254 = vmatpush.msra.mxu0 0.0
    %255 = vmatpush.msra.mxu0 %v112
    %256 = vmatpush.msra.mxu0 %v111
    %257 = vmatpush.msra.mxu0 %v110
    %258 = vmatpush.msra.mxu0 %v109
    %259 = vmatmul.f32.gmra.mxu0 %v241
    %v260 = vpop.f32.mrf.mxu0
    %v261 = vadd.f32 0.0, %v260
    %262 = vdwg.mxu0
    %v263 = vadd.f32 %v101, %v261
    %v264 = vtanh.pop %v263
    %v266 = vsel %vm114, %v264, 0
    %268 = vmatpush.msra.mxu0 0.0
    %269 = vmatpush.msra.mxu0 0.0
    %270 = vmatpush.msra.mxu0 0.0
    %271 = vmatpush.msra.mxu0 0.0
    %272 = vmatpush.msra.mxu0 0.0
    %273 = vmatpush.msra.mxu0 0.0
    %274 = vmatpush.msra.mxu0 0.0
    %275 = vmatpush.msra.mxu0 0.0
    %276 = vmatpush.msra.mxu0 0.0
    %277 = vmatpush.msra.mxu0 0.0
    %278 = vmatpush.msra.mxu0 0.0
    %279 = vmatpush.msra.mxu0 0.0
    %280 = vmatpush.msra.mxu0 %v112
    %281 = vmatpush.msra.mxu0 %v111
    %282 = vmatpush.msra.mxu0 %v110
    %283 = vmatpush.msra.mxu0 %v109
    %284 = vmatmul.f32.gmra.mxu0 %v266
    %v285 = vpop.f32.mrf.mxu0
    %v286 = vadd.f32 0.0, %v285
    %287 = vdwg.mxu0
    %v288 = vadd.f32 %v104, %v286
    %v289 = vtanh.pop %v288
    %v291 = vsel %vm114, %v289, 0
    %293 = vmatpush.msra.mxu0 0.0
    %294 = vmatpush.msra.mxu0 0.0
    %295 = vmatpush.msra.mxu0 0.0
    %296 = vmatpush.msra.mxu0 0.0
    %297 = vmatpush.msra.mxu0 0.0
    %298 = vmatpush.msra.mxu0 0.0
    %299 = vmatpush.msra.mxu0 0.0
    %300 = vmatpush.msra.mxu0 0.0
    %301 = vmatpush.msra.mxu0 0.0
    %302 = vmatpush.msra.mxu0 0.0
    %303 = vmatpush.msra.mxu0 0.0
    %304 = vmatpush.msra.mxu0 0.0
    %305 = vmatpush.msra.mxu0 %v112
    %306 = vmatpush.msra.mxu0 %v111
    %307 = vmatpush.msra.mxu0 %v110
    %308 = vmatpush.msra.mxu0 %v109
    %309 = vmatmul.f32.gmra.mxu0 %v291
    %v310 = vpop.f32.mrf.mxu0
    %v311 = vadd.f32 0.0, %v310
    %312 = vdwg.mxu0
    %v313 = vadd.f32 %v107, %v311
    %v314 = vtanh.pop %v313
    %315 = vst.msk [vmem:[#allocation2] sm:$0xff] %vm114, %v314
    %v316 = vld [vmem:[%s4] sm:$0xff]
    %v317 = vld [vmem:[%s4 + $0x8] sm:$0xff]
    %v318 = vld [vmem:[%s4 + $0x10] sm:$0xff]
    %v319 = vld [vmem:[%s4 + $0x18] sm:$0xff]
    %v320 = vld [vmem:[%s6] sm:$0x1]
    %v322 = vperm.slane %v320, 0
    %v325 = vsel %vm114, %v314, 0
    %327 = vmatpush.msra.mxu0 0.0
    %328 = vmatpush.msra.mxu0 0.0
    %329 = vmatpush.msra.mxu0 0.0
    %330 = vmatpush.msra.mxu0 0.0
    %331 = vmatpush.msra.mxu0 0.0
    %332 = vmatpush.msra.mxu0 0.0
    %333 = vmatpush.msra.mxu0 0.0
    %334 = vmatpush.msra.mxu0 0.0
    %335 = vmatpush.msra.mxu0 0.0
    %336 = vmatpush.msra.mxu0 0.0
    %337 = vmatpush.msra.mxu0 0.0
    %338 = vmatpush.msra.mxu0 0.0
    %339 = vmatpush.msra.mxu0 %v319
    %340 = vmatpush.msra.mxu0 %v318
    %341 = vmatpush.msra.mxu0 %v317
    %342 = vmatpush.msra.mxu0 %v316
    %343 = vmatmul.f32.gmra.mxu0 %v141
    %v344 = vpop.f32.mrf.mxu0
    %v345 = vadd.f32 %v322, %v344
    %346 = vmatmul.f32.gmra.mxu0 %v166
    %v347 = vpop.f32.mrf.mxu0
    %v348 = vadd.f32 %v322, %v347
    %349 = vmatmul.f32.gmra.mxu0 %v191
    %v350 = vpop.f32.mrf.mxu0
    %v351 = vadd.f32 %v322, %v350
    %352 = vmatmul.f32.gmra.mxu0 %v216
    %v353 = vpop.f32.mrf.mxu0
    %v354 = vadd.f32 %v322, %v353
    %355 = vmatmul.f32.gmra.mxu0 %v241
    %v356 = vpop.f32.mrf.mxu0
    %v357 = vadd.f32 %v322, %v356
    %358 = vmatmul.f32.gmra.mxu0 %v266
    %v359 = vpop.f32.mrf.mxu0
    %v360 = vadd.f32 %v322, %v359
    %361 = vmatmul.f32.gmra.mxu0 %v291
    %v362 = vpop.f32.mrf.mxu0
    %v363 = vadd.f32 %v322, %v362
    %364 = vmatmul.f32.gmra.mxu0 %v325
    %v365 = vpop.f32.mrf.mxu0
    %v366 = vadd.f32 %v322, %v365
    %367 = vdwg.mxu0
    %vm368 = vcmp.ge.f32.partialorder %v345, 0.0
    %vm369 = vcmp.ge.f32.partialorder %v348, 0.0
    %vm370 = vcmp.ge.f32.partialorder %v351, 0.0
    %vm371 = vcmp.ge.f32.partialorder %v354, 0.0
    %vm372 = vcmp.ge.f32.partialorder %v357, 0.0
    %vm373 = vcmp.ge.f32.partialorder %v360, 0.0
    %vm374 = vcmp.ge.f32.partialorder %v363, 0.0
    %vm375 = vcmp.ge.f32.partialorder %v366, 0.0
    %v376 = vmul.f32 %v345, 0.01
    %v377 = vmul.f32 %v348, 0.01
    %v378 = vmul.f32 %v351, 0.01
    %v379 = vmul.f32 %v354, 0.01
    %v380 = vmul.f32 %v357, 0.01
    %v381 = vmul.f32 %v360, 0.01
    %v382 = vmul.f32 %v363, 0.01
    %v383 = vmul.f32 %v366, 0.01
    %v384 = vsel %vm368, %v345, %v376
    %v385 = vsel %vm369, %v348, %v377
    %v386 = vsel %vm370, %v351, %v378
    %v387 = vsel %vm371, %v354, %v379
    %v388 = vsel %vm372, %v357, %v380
    %v389 = vsel %vm373, %v360, %v381
    %v390 = vsel %vm374, %v363, %v382
    %v391 = vsel %vm375, %v366, %v383
    %392 = vst.msk [vmem:[%s7] sm:$0xff] %vm43, %v384
    %393 = vst.msk [vmem:[%s7 + $0x8] sm:$0xff] %vm43, %v385
    %394 = vst.msk [vmem:[%s7 + $0x10] sm:$0xff] %vm43, %v386
    %395 = vst.msk [vmem:[%s7 + $0x18] sm:$0xff] %vm43, %v387
    %396 = vst.msk [vmem:[%s7 + $0x20] sm:$0xff] %vm43, %v388
    %397 = vst.msk [vmem:[%s7 + $0x28] sm:$0xff] %vm43, %v389
    %398 = vst.msk [vmem:[%s7 + $0x30] sm:$0xff] %vm43, %v390
    %399 = vst.msk [vmem:[%s7 + $0x38] sm:$0xff] %vm43, %v391
    // Predicated region
    $region30: #{tpu_custom_call.1} parent=1 // pred_check
      _
    $region31: #{tpu_custom_call.1} parent=1 // pred_check_branch
      %401 = sbr.rel (0) target = $region33
    $region32: #{tpu_custom_call.1} parent=1 // pred_region
      _
    $region33: #{tpu_custom_call.1} parent=1 // pred_fallthru
      _
    // Predicated region
    $region34: #{tpu_custom_call.1} parent=1 // pred_check
      _
    $region35: #{tpu_custom_call.1} parent=1 // pred_check_branch
      %403 = sbr.rel (0) target = $region37
    $region36: #{tpu_custom_call.1} parent=1 // pred_region
      %405 = vsyncadd [#allocation3], 0
      %s407 = sshll.u32 [#allocation2], 4
      %s408 = int_to_ptr.vmem [resolvable:$true] %s407
      %s409 = sshll.u32 %s8, 4
      %s410 = int_to_ptr.hbm [resolvable:$true] %s409
      %412 = dma.vmem_to_hbm [thread:$0]  %s408, 128, %s410, [#allocation3]
    $region37: #{tpu_custom_call.1} parent=1 // pred_fallthru
      _
    // Predicated region
    $region38: #{tpu_custom_call.1} parent=1 // pred_check
      _
    $region39: #{tpu_custom_call.1} parent=1 // pred_check_branch
      %414 = sbr.rel (0) target = $region41
    $region40: #{tpu_custom_call.1} parent=1 // pred_region
      _
    $region41: #{tpu_custom_call.1} parent=1 // pred_fallthru
      _
    // Predicated region
    $region42: #{tpu_custom_call.1} parent=1 // pred_check
      _
    $region43: #{tpu_custom_call.1} parent=1 // pred_check_branch
      %416 = sbr.rel (0) target = $region45
    $region44: #{tpu_custom_call.1} parent=1 // pred_region
      %418 = dma.done [#allocation3], 128
    $region45: #{tpu_custom_call.1} parent=1 // pred_fallthru
      _
    %419 = vsyncpa [#allocation3], 1

</llo_original>
